<compile_context>
chip_gen: v5e
topology: v5e:2x2
jax: 0.10.0
libtpu: 0.0.40
codegen_flags: <defaults>
</compile_context>

<pallas_src>
import functools

import jax
import jax.numpy as jnp
from jax import lax
from jax.experimental import pallas as pl
from jax.experimental.pallas import tpu as pltpu


# ----------------------------------------------------------------------------
# Pallas kernel: one fused matmul + gating per lane-dense spatial tile
# ----------------------------------------------------------------------------
def _fused_gated_conv_kernel(p_ref, w_ref, b_ref, o_ref, *, cout):
    # p_ref: (Kdim, tileM)    bf16  transposed im2col patch tile (lanes = spatial)
    # w_ref: (2*cout, Kdim)   bf16  fused [w1; w2] weight matrix
    # b_ref: (2*cout, 1)      f32   fused bias column
    # o_ref: (cout, tileM)    f32   gated output tile (lane-dense)
    z = jnp.dot(w_ref[...], p_ref[...], preferred_element_type=jnp.float32)
    z = z + b_ref[...]                       # broadcast bias over lanes
    z1 = z[:cout, :]                         # conv1 pre-activation
    z2 = z[cout:, :]                         # conv2 pre-activation
    gate = jax.nn.sigmoid(z1)
    # ELU(alpha=1): x if x > 0 else exp(x) - 1 (clamp exp arg for safety)
    elu = jnp.where(z2 > 0, z2, jnp.exp(jnp.minimum(z2, 0.0)) - 1.0)
    o_ref[...] = (gate * elu).astype(o_ref.dtype)


def _pick_tile_m(m_pad):
    """Largest lane-aligned tile dividing m_pad that still leaves >=2 grid steps
    (pipelining + v7x megacore); otherwise take everything in one step."""
    for t in (2048, 1024, 512, 256, 128):
        if t < m_pad and m_pad % t == 0:
            return t
    return m_pad


def _vmem_limit_bytes(kdim, tile_m, cout, compute_bytes):
    need = (2 * kdim * tile_m * compute_bytes        # double-buffered patch tile
            + 2 * cout * tile_m * 4                  # double-buffered output tile
            + 2 * 2 * cout * kdim * compute_bytes    # fused weights
            + 2 * 2 * cout * 4)                      # bias
    # generous headroom, but stay well under v7x's 64 MiB physical VMEM
    return int(min(48 * 1024 * 1024, max(8 * need, 4 * 1024 * 1024)))


# ----------------------------------------------------------------------------
# Wrapper: NCHW in / NCHW out, builds transposed im2col + fused weights
# ----------------------------------------------------------------------------
def gated_conv_forward_nchw(x_nchw, w1, b1, w2, b2, *, stride=1, pad=1,
                            compute_dtype=jnp.bfloat16):
    B, Cin, H, W = x_nchw.shape
    Cout, _, K, _ = w1.shape
    Ho = (H + 2 * pad - K) // stride + 1
    Wo = (W + 2 * pad - K) // stride + 1
    kdim = K * K * Cin
    m = B * Ho * Wo

    # --- wrapper-side glue (plain XLA): transposed im2col (kdim, B*Ho*Wo) ---
    xp = jnp.pad(x_nchw, ((0, 0), (0, 0), (pad, pad), (pad, pad)))
    taps = []
    for kh in range(K):
        for kw in range(K):
            taps.append(xp[:, :,
                           kh:kh + (Ho - 1) * stride + 1:stride,
                           kw:kw + (Wo - 1) * stride + 1:stride])
    p = jnp.stack(taps, axis=0)                               # (K*K, B, Cin, Ho, Wo)
    p_t = jnp.transpose(p, (0, 2, 1, 3, 4)).reshape(kdim, m)  # rows: tap-major, cin-minor

    # pad spatial axis up to a lane multiple (kernel output stays unmasked)
    m_pad = ((m + 127) // 128) * 128
    if m_pad != m:
        p_t = jnp.pad(p_t, ((0, 0), (0, m_pad - m)))

    # --- fused weights [w1; w2]: (2*Cout, K*K*Cin), row order = (kh, kw, cin)
    def repack(w):
        return jnp.transpose(w, (0, 2, 3, 1)).reshape(Cout, kdim)
    w_fused = jnp.concatenate([repack(w1), repack(w2)], axis=0)
    b_fused = jnp.concatenate([b1, b2]).reshape(2 * Cout, 1).astype(jnp.float32)

    tile_m = _pick_tile_m(m_pad)
    compute_bytes = jnp.dtype(compute_dtype).itemsize
    kernel = functools.partial(_fused_gated_conv_kernel, cout=Cout)

    out_flat = pl.pallas_call(
        kernel,
        out_shape=jax.ShapeDtypeStruct((Cout, m_pad), jnp.float32),
        grid_spec=pltpu.PrefetchScalarGridSpec(
            num_scalar_prefetch=0,
            grid=(m_pad // tile_m,),
            in_specs=[
                pl.BlockSpec((kdim, tile_m), lambda i: (0, i)),       # patches^T
                pl.BlockSpec((2 * Cout, kdim), lambda i: (0, 0)),     # fused W
                pl.BlockSpec((2 * Cout, 1), lambda i: (0, 0)),        # fused bias
            ],
            out_specs=pl.BlockSpec((Cout, tile_m), lambda i: (0, i)),
        ),
        compiler_params=pltpu.CompilerParams(
            dimension_semantics=("parallel",),
            vmem_limit_bytes=_vmem_limit_bytes(kdim, tile_m, Cout, compute_bytes)),
    )(p_t.astype(compute_dtype), w_fused.astype(compute_dtype), b_fused)

    out = out_flat[:, :m].reshape(Cout, B, Ho, Wo)
    return jnp.transpose(out, (1, 0, 2, 3)).astype(x_nchw.dtype)


# ----------------------------------------------------------------------------
# Parameter setup (glue, plain JAX): deterministic init + spectral norm
# ----------------------------------------------------------------------------
def spectral_normalize(w, key, n_iter=20, eps=1e-4):
    out_ch = w.shape[0]
    w_mat = w.reshape(out_ch, -1)
    u = jax.random.normal(key, (out_ch,), dtype=w.dtype)
    u = u / (jnp.linalg.norm(u) + eps)
    for _ in range(n_iter):
        v = w_mat.T @ u
        v = v / (jnp.linalg.norm(v) + eps)
        u = w_mat @ v
        u = u / (jnp.linalg.norm(u) + eps)
    sigma = u @ (w_mat @ v)
    return w / sigma


def init_gated_conv_params(key, in_ch, out_ch, ksize=3):
    k1, k2, k3, k4, k5, k6 = jax.random.split(key, 6)
    fan_in = in_ch * ksize * ksize
    bound = 1.0 / jnp.sqrt(fan_in)
    w1 = jax.random.uniform(k1, (out_ch, in_ch, ksize, ksize), jnp.float32,
                            -bound, bound)
    b1 = jax.random.uniform(k2, (out_ch,), jnp.float32, -bound, bound)
    w2 = jax.random.uniform(k3, (out_ch, in_ch, ksize, ksize), jnp.float32,
                            -bound, bound)
    b2 = jax.random.uniform(k4, (out_ch,), jnp.float32, -bound, bound)
    w1 = spectral_normalize(w1, k5)
    w2 = spectral_normalize(w2, k6)
    return w1, b1, w2, b2


# ----------------------------------------------------------------------------
# Reference (plain JAX) for correctness checking
# ----------------------------------------------------------------------------
def reference_forward_nchw(x_nchw, w1, b1, w2, b2, *, stride=1, pad=1):
    dn = lax.conv_dimension_numbers(x_nchw.shape, w1.shape,
                                    ("NCHW", "OIHW", "NCHW"))
    c1 = lax.conv_general_dilated(x_nchw, w1, (stride, stride),
                                  ((pad, pad), (pad, pad)),
                                  dimension_numbers=dn) + b1[None, :, None, None]
    c2 = lax.conv_general_dilated(x_nchw, w2, (stride, stride),
                                  ((pad, pad), (pad, pad)),
                                  dimension_numbers=dn) + b2[None, :, None, None]
    elu = jnp.where(c2 > 0, c2, jnp.exp(jnp.minimum(c2, 0.0)) - 1.0)
    return jax.nn.sigmoid(c1) * elu


if __name__ == "__main__":
    B, Cin, H, W = 2, 4, 16, 16
    Cout = 8

    key = jax.random.PRNGKey(0)
    kx, kp = jax.random.split(key)
    x = jax.random.normal(kx, (B, Cin, H, W), dtype=jnp.float32)
    w1, b1, w2, b2 = init_gated_conv_params(kp, Cin, Cout)

    # stride=1 (GatedConv default) and stride=2 (as used by the enc* layers)
    for stride in (1, 2):
        out = gated_conv_forward_nchw(x, w1, b1, w2, b2, stride=stride)
        out = jax.block_until_ready(out)
        ref = reference_forward_nchw(x, w1, b1, w2, b2, stride=stride)
        Ho = (H + 2 - 3) // stride + 1
        assert out.shape == (B, Cout, Ho, Ho), out.shape
        # bf16 matmul with f32 accumulation -> loosened tolerance
        assert jnp.allclose(out, ref, atol=5e-2, rtol=5e-2), (
            f"mismatch vs reference (stride={stride})")

    print("KERNEL_OK")
</pallas_src>

<mosaic_0001>
module attributes {stable_mosaic.version = 11 : i64} {
  func.func @_fused_gated_conv_kernel(%arg0: i32, %arg1: memref<36x256xbf16, #tpu.memory_space<vmem>>, %arg2: memref<16x36xbf16, #tpu.memory_space<vmem>>, %arg3: memref<16x1xf32, #tpu.memory_space<vmem>>, %arg4: memref<8x256xf32, #tpu.memory_space<vmem>>) attributes {dimension_semantics = [#tpu.dimension_semantics<parallel>], iteration_bounds = array<i64: 2>, scalar_prefetch = 0 : i64, scratch_operands = 0 : i64, tpu.core_type = #tpu.core_type<tc>, window_params = [{transform_indices = @transform_0, window_bounds = array<i64: 36, 256>}, {pipeline_mode = #tpu.pipeline_mode<synchronous>, transform_indices = @transform_1, window_bounds = array<i64: 16, 36>}, {pipeline_mode = #tpu.pipeline_mode<synchronous>, transform_indices = @transform_2, window_bounds = array<i64: 16, 1>}, {transform_indices = @transform_3, window_bounds = array<i64: 8, 256>}]} {
    %c0 = arith.constant 0 : index
    %c0_0 = arith.constant 0 : index
    %0 = vector.load %arg2[%c0, %c0_0] : memref<16x36xbf16, #tpu.memory_space<vmem>>, vector<16x36xbf16>
    %c0_1 = arith.constant 0 : index
    %c0_2 = arith.constant 0 : index
    %1 = vector.load %arg1[%c0_1, %c0_2] : memref<36x256xbf16, #tpu.memory_space<vmem>>, vector<36x256xbf16>
    %cst = arith.constant dense<0.000000e+00> : vector<16x256xf32>
    %2 = tpu.matmul %0, %1, %cst {dimension_numbers = #tpu.dot_dimension_numbers<[1], [0], [0], [1], [0, 0, 1, 1], [], []>} : vector<16x36xbf16>, vector<36x256xbf16>, vector<16x256xf32> -> vector<16x256xf32>
    %c0_3 = arith.constant 0 : index
    %c0_4 = arith.constant 0 : index
    %3 = vector.load %arg3[%c0_3, %c0_4] : memref<16x1xf32, #tpu.memory_space<vmem>>, vector<16x1xf32>
    %4 = vector.broadcast %3 : vector<16x1xf32> to vector<16x256xf32>
    %5 = arith.addf %2, %4 : vector<16x256xf32>
    %6 = vector.extract_strided_slice %5 {offsets = [0, 0], sizes = [8, 256], strides = [1, 1]} : vector<16x256xf32> to vector<8x256xf32>
    %7 = vector.extract_strided_slice %5 {offsets = [8, 0], sizes = [8, 256], strides = [1, 1]} : vector<16x256xf32> to vector<8x256xf32>
    %8 = arith.negf %6 : vector<8x256xf32>
    %9 = math.exp %8 : vector<8x256xf32>
    %cst_5 = arith.constant 1.000000e+00 : f32
    %10 = vector.broadcast %cst_5 : f32 to vector<8x256xf32>
    %11 = arith.addf %10, %9 : vector<8x256xf32>
    %12 = arith.divf %10, %11 : vector<8x256xf32>
    %cst_6 = arith.constant 0.000000e+00 : f32
    %13 = vector.broadcast %cst_6 : f32 to vector<8x256xf32>
    %14 = arith.cmpf ogt, %7, %13 : vector<8x256xf32>
    %cst_7 = arith.constant 0.000000e+00 : f32
    %15 = vector.broadcast %cst_7 : f32 to vector<8x256xf32>
    %16 = arith.minimumf %7, %15 : vector<8x256xf32>
    %17 = math.exp %16 : vector<8x256xf32>
    %cst_8 = arith.constant 1.000000e+00 : f32
    %18 = vector.broadcast %cst_8 : f32 to vector<8x256xf32>
    %19 = arith.subf %17, %18 : vector<8x256xf32>
    %20 = arith.select %14, %7, %19 : vector<8x256xi1>, vector<8x256xf32>
    %21 = arith.mulf %12, %20 : vector<8x256xf32>
    %c0_9 = arith.constant 0 : index
    %c0_10 = arith.constant 0 : index
    %22 = vector.load %arg4[%c0_9, %c0_10] : memref<8x256xf32, #tpu.memory_space<vmem>>, vector<8x256xf32>
    tpu.vector_store %arg4[%c0_9, %c0_10], %21 {strides = array<i32>} : memref<8x256xf32, #tpu.memory_space<vmem>>, vector<8x256xf32>,
    return
  }
  func.func @transform_0(%arg0: i32) -> (i32, i32) {
    %c0_i32 = arith.constant 0 : i32
    %c0_i32_0 = arith.constant 0 : i32
    return %c0_i32, %arg0 : i32, i32
  }
  func.func @transform_1(%arg0: i32) -> (i32, i32) {
    %c0_i32 = arith.constant 0 : i32
    %c0_i32_0 = arith.constant 0 : i32
    %c0_i32_1 = arith.constant 0 : i32
    return %c0_i32, %c0_i32_0 : i32, i32
  }
  func.func @transform_2(%arg0: i32) -> (i32, i32) {
    %c0_i32 = arith.constant 0 : i32
    %c0_i32_0 = arith.constant 0 : i32
    %c0_i32_1 = arith.constant 0 : i32
    return %c0_i32, %c0_i32_0 : i32, i32
  }
  func.func @transform_3(%arg0: i32) -> (i32, i32) {
    %c0_i32 = arith.constant 0 : i32
    %c0_i32_0 = arith.constant 0 : i32
    return %c0_i32, %arg0 : i32, i32
  }
}

</mosaic_0001>

<llo_original>
// kernel: tpu_custom_call.1
$region0: #{tpu_custom_call.1}
  #allocation0 [shape = 'u32[]', space=smem, size = 0x4, offset = 0x4, fixed_abs, tag = 'smem constant byte address 0x4 - core index']
  #allocation1 [shape = 'u32[72,128]{1,0:T(1,128)}', space=vmem, size = 0x9000, scoped, tag = 'internal scratch']
  %s0 = inlined_call_operand.hbm [shape: bf16[36,512], index: 0, kind: input, shape index: {}]
  %s1 = inlined_call_operand.vmem [shape: bf16[16,36], index: 1, kind: input, shape index: {}]
  %s2 = inlined_call_operand.vmem [shape: f32[16,1], index: 2, kind: input, shape index: {}]
  %s3 = inlined_call_operand.hbm [shape: f32[8,512], index: 3, kind: output, shape index: {}]
  %s4 = sld [smem:[#allocation0]]
  $region49: #{tpu_custom_call.1} parent=0
    _
  %s6 = ssub.s32 1, %s4
  %s7 = scalar_select 0, %s6, %s4
  $region1: #{tpu_custom_call.1} parent=0
    #allocation2 [shape = 'u8[40960]{0}', space=vmem, size = 0xa000, scoped, tag = 'input window, operand 0']
    #allocation3 [shape = 's32[2]{0}', space=sflag, size = 0x8, scoped, tag = 'scoped memory for tpu_custom_call.1']
    #allocation4 [shape = 's32[2]{0}', space=sflag, size = 0x8, scoped, tag = 'scoped memory for tpu_custom_call.1']
    #allocation5 [shape = 'u8[16384]{0}', space=vmem, size = 0x4000, scoped, tag = 'output window, operand 0']
    %8 = vsyncpa [#allocation3], 0
    %s9 = scalar_lea.sflag [#allocation3], 1
    %10 = vsyncpa %s9, 0
    %11 = vsyncpa [#allocation4], 0
    %s12 = scalar_lea.sflag [#allocation4], 1
    %13 = vsyncpa %s12, 0
    loop: start=0, step=1, limit=4
    $region2: #{tpu_custom_call.1} parent=1 // loop_pre_header
      _
    $region3: #{tpu_custom_call.1} parent=1 // loop_header
      %s15 = sphi 0, %s19
      %p16 = scmp.ge.s32.totalorder %s15, 4
      %s25 = sphi 0, %s27
      %s28 = sphi 0, %s25
      %s29 = sphi 0, %s28
      %s45 = sphi 0, %s29
      %s49 = sphi 0, %s49
      %s51 = sphi 0, %s49
      %s52 = sphi 0, %s51
      %s66 = sphi 0, %s52
      %s70 = sphi 0, %s70
      %s72 = sphi 0, %s70
      %s73 = sphi 0, %s72
      %s87 = sphi 0, %s73
      %s93 = sphi 0, %s95
      %s96 = sphi 0, %s93
      %s97 = sphi 0, %s96
      %s113 = sphi 0, %s97
    $region4: #{tpu_custom_call.1} parent=1 // loop_header_branch
      %18 = sbr.rel (%p16) target = $region8
    $region5: #{tpu_custom_call.1} parent=1 // loop_body
      %s20 = ssub.s32 %s15, 1
      %s21 = ssub.s32 %s15, 2
      %s22 = sadd.s32 %s15, 1
      %s23 = ssub.s32 %s15, %s22
      %p24 = scmp.eq.s32.totalorder %s23, 0
      %s26 = sadd.s32 %s25, 1
      %s27 = scalar_select %p24, %s25, %s26
      %p30 = pneg %p24
      %p31 = scmp.eq.s32.totalorder %s15, 1
      %p32 = por %p30, %p31
      %p33 = scmp.ne.s32.totalorder %s25, %s28
      %p34 = scmp.eq.s32.totalorder %s15, 0
      %p35 = por %p33, %p34
      %p36 = scmp.ne.s32.totalorder %s25, %s28
      %p37 = scmp.eq.s32.totalorder %s20, 1
      %p38 = por %p36, %p37
      %p39 = scmp.ne.s32.totalorder %s28, %s29
      %p40 = scmp.eq.s32.totalorder %s20, 0
      %p41 = por %p39, %p40
      %p42 = scmp.ne.s32.totalorder %s28, %s29
      %p43 = scmp.eq.s32.totalorder %s21, 1
      %p44 = por %p42, %p43
      %p46 = scmp.ne.s32.totalorder %s29, %s45
      %p47 = scmp.eq.s32.totalorder %s21, 0
      %p48 = por %p46, %p47
      %s50 = sadd.s32 %s49, 1
      %p53 = scmp.eq.s32.totalorder %s15, 1
      %p54 = scmp.ne.s32.totalorder %s49, %s51
      %p55 = scmp.eq.s32.totalorder %s15, 0
      %p56 = por %p54, %p55
      %p57 = scmp.ne.s32.totalorder %s49, %s51
      %p58 = scmp.eq.s32.totalorder %s20, 1
      %p59 = por %p57, %p58
      %p60 = scmp.ne.s32.totalorder %s51, %s52
      %p61 = scmp.eq.s32.totalorder %s20, 0
      %p62 = por %p60, %p61
      %p63 = scmp.ne.s32.totalorder %s51, %s52
      %p64 = scmp.eq.s32.totalorder %s21, 1
      %p65 = por %p63, %p64
      %p67 = scmp.ne.s32.totalorder %s52, %s66
      %p68 = scmp.eq.s32.totalorder %s21, 0
      %p69 = por %p67, %p68
      %s71 = sadd.s32 %s70, 1
      %p74 = scmp.eq.s32.totalorder %s15, 1
      %p75 = scmp.ne.s32.totalorder %s70, %s72
      %p76 = scmp.eq.s32.totalorder %s15, 0
      %p77 = por %p75, %p76
      %p78 = scmp.ne.s32.totalorder %s70, %s72
      %p79 = scmp.eq.s32.totalorder %s20, 1
      %p80 = por %p78, %p79
      %p81 = scmp.ne.s32.totalorder %s72, %s73
      %p82 = scmp.eq.s32.totalorder %s20, 0
      %p83 = por %p81, %p82
      %p84 = scmp.ne.s32.totalorder %s72, %s73
      %p85 = scmp.eq.s32.totalorder %s21, 1
      %p86 = por %p84, %p85
      %p88 = scmp.ne.s32.totalorder %s73, %s87
      %p89 = scmp.eq.s32.totalorder %s21, 0
      %p90 = por %p88, %p89
      %s91 = ssub.s32 %s15, %s22
      %p92 = scmp.eq.s32.totalorder %s91, 0
      %s94 = sadd.s32 %s93, 1
      %s95 = scalar_select %p92, %s93, %s94
      %p98 = pneg %p92
      %p99 = scmp.eq.s32.totalorder %s15, 1
      %p100 = por %p98, %p99
      %p101 = scmp.ne.s32.totalorder %s93, %s96
      %p102 = scmp.eq.s32.totalorder %s15, 0
      %p103 = por %p101, %p102
      %p104 = scmp.ne.s32.totalorder %s93, %s96
      %p105 = scmp.eq.s32.totalorder %s20, 1
      %p106 = por %p104, %p105
      %p107 = scmp.ne.s32.totalorder %s96, %s97
      %p108 = scmp.eq.s32.totalorder %s20, 0
      %p109 = por %p107, %p108
      %p110 = scmp.ne.s32.totalorder %s96, %s97
      %p111 = scmp.eq.s32.totalorder %s21, 1
      %p112 = por %p110, %p111
      %p114 = scmp.ne.s32.totalorder %s97, %s113
      %p115 = scmp.eq.s32.totalorder %s21, 0
      %p116 = por %p114, %p115
      %p117 = scmp.le.s32.totalorder 1, %s15
      %p118 = scmp.lt.s32.totalorder %s15, 3
      %p119 = pnand %p117, %p118
      %p120 = pneg %p119
      // Predicated region
      $region9: #{tpu_custom_call.1} parent=5 // pred_check
        _
      $region10: #{tpu_custom_call.1} parent=5 // pred_check_branch
        %122 = sbr.rel (%p119) target = $region12
      $region11: #{tpu_custom_call.1} parent=5 // pred_region
        %s123 = ssub.s32 %s15, 1
        // Predicated region
        $region13: #{tpu_custom_call.1} parent=11 // pred_check
          %p124 = pneg %p62
        $region14: #{tpu_custom_call.1} parent=11 // pred_check_branch
          %126 = sbr.rel (%p124) target = $region16
        $region15: #{tpu_custom_call.1} parent=11 // pred_region
          _
        $region16: #{tpu_custom_call.1} parent=11 // pred_fallthru
          _
        // Predicated region
        $region17: #{tpu_custom_call.1} parent=11 // pred_check
          %p127 = pneg %p83
        $region18: #{tpu_custom_call.1} parent=11 // pred_check_branch
          %129 = sbr.rel (%p127) target = $region20
        $region19: #{tpu_custom_call.1} parent=11 // pred_region
          _
        $region20: #{tpu_custom_call.1} parent=11 // pred_fallthru
          _
      $region12: #{tpu_custom_call.1} parent=5 // pred_fallthru
        _
      %p130 = scmp.lt.s32.totalorder %s15, 2
      // Predicated region
      $region21: #{tpu_custom_call.1} parent=5 // pred_check
        %p131 = pneg %p130
      $region22: #{tpu_custom_call.1} parent=5 // pred_check_branch
        %133 = sbr.rel (%p131) target = $region24
      $region23: #{tpu_custom_call.1} parent=5 // pred_region
        // Predicated region
        $region25: #{tpu_custom_call.1} parent=23 // pred_check
          %p134 = pneg %p35
        $region26: #{tpu_custom_call.1} parent=23 // pred_check_branch
          %136 = sbr.rel (%p134) target = $region28
        $region27: #{tpu_custom_call.1} parent=23 // pred_region
          %s137 = sand.u32 %s25, 1
          %s138 = scalar_lea.sflag [#allocation3], %s137
          %s139 = sand.u32 %s25, 1
          %s140 = smul.addr %s139, 40
          %s141 = scalar_lea.vmem [#allocation2], %s140
          %s142 = smul.u32 2, %s15
          %144 = vsyncadd %s138, 0
          %s145 = smul.addr %s142, 4
          %s146 = scalar_lea.hbm %s0, %s145
          %s147 = sshll.u32 %s146, 4
          %s148 = int_to_ptr.hbm [resolvable:$true] %s147
          %s149 = sshll.u32 %s141, 4
          %s150 = int_to_ptr.vmem [resolvable:$true] %s149
          %155 = dma.hbm_to_vmem [thread:$0]  %s148, 640, %s150, %s138, 256, 128, 8
        $region28: #{tpu_custom_call.1} parent=23 // pred_fallthru
          _
      $region24: #{tpu_custom_call.1} parent=5 // pred_fallthru
        _
      %p156 = scmp.le.s32.totalorder 1, %s15
      %p157 = scmp.lt.s32.totalorder %s15, 3
      %p158 = pnand %p156, %p157
      %p159 = pneg %p158
      // Predicated region
      $region29: #{tpu_custom_call.1} parent=5 // pred_check
        _
      $region30: #{tpu_custom_call.1} parent=5 // pred_check_branch
        %161 = sbr.rel (%p158) target = $region32
      $region31: #{tpu_custom_call.1} parent=5 // pred_region
        %s162 = ssub.s32 %s15, 1
        %s163 = sand.u32 %s28, 1
        %s164 = scalar_lea.sflag [#allocation3], %s163
        %s165 = sand.u32 %s28, 1
        %s166 = smul.addr %s165, 40
        %s167 = scalar_lea.vmem [#allocation2], %s166
        // Predicated region
        $region33: #{tpu_custom_call.1} parent=31 // pred_check
          %p168 = pneg %p41
        $region34: #{tpu_custom_call.1} parent=31 // pred_check_branch
          %170 = sbr.rel (%p168) target = $region36
        $region35: #{tpu_custom_call.1} parent=31 // pred_region
          %172 = dma.done %s164, 640
        $region36: #{tpu_custom_call.1} parent=31 // pred_fallthru
          _
        %s173 = sand.u32 %s28, 1
        %s174 = scalar_lea.sflag [#allocation3], %s173
        %s175 = sand.u32 %s28, 1
        %s176 = smul.addr %s175, 40
        %s177 = scalar_lea.vmem [#allocation2], %s176
        %p178 = pneg %p41
        %p179 = pneg %p38
        %p180 = pneg %p62
        %p181 = pneg %p59
        %p182 = pneg %p83
        %p183 = pneg %p80
        %p184 = pneg %p109
        %p185 = pneg %p106
        %s186 = sand.u32 %s96, 1
        %s187 = scalar_lea.sflag [#allocation4], %s186
        %s188 = sand.u32 %s96, 1
        %s189 = smul.addr %s188, 16
        %s190 = scalar_lea.vmem [#allocation5], %s189
        %s191 = smul.u32 2, %s20
        %s192 = smul.u32 2, %s20
        %v194 = vld [vmem:[%s1] sm:$0xf]
        %v195 = vld [vmem:[%s1 + $0x4] sm:$0xf]
        %v196 = vld [vmem:[%s167] sm:$0xff]
        %v197 = vld [vmem:[%s167 + $0x8] sm:$0xff]
        %v198 = vld [vmem:[%s167 + $0x10] sm:$0xff]
        %v199 = vld [vmem:[%s167 + $0x18] sm:$0xff]
        %v200 = vld [vmem:[%s167 + $0x20] sm:$0x33]
        %v201 = vld [vmem:[%s2] sm:$0xff]
        %v202 = vld [vmem:[%s2 + $0x8] sm:$0xff]
        %204 = vset.pattern.permute.xlu0 0
        %205 = vperm.xlu0 %204, %v201
        %v206 = vpop.permute.xlu0 %205
        %209 = vset.pattern.permute.xlu0 0
        %210 = vperm.xlu0 %209, %v202
        %v211 = vpop.permute.xlu0 %210
        %v215 = vunpack.c.l.b16 %v194
        %v216 = vunpack.c.l.b16 %v195
        %v217 = vpack.c.b16 %v216, %v215
        %v223 = vunpack.c.l.b16 %v196
        %v224 = vunpack.c.h.b16 %v196
        %v225 = vunpack.c.l.b16 %v197
        %v226 = vunpack.c.h.b16 %v197
        %v227 = vunpack.c.l.b16 %v198
        %v228 = vunpack.c.h.b16 %v198
        %v229 = vunpack.c.l.b16 %v199
        %v230 = vunpack.c.h.b16 %v199
        %v231 = vunpack.c.l.b16 %v200
        %v232 = vunpack.c.h.b16 %v200
        %v233 = vpack.c.b16 %v225, %v223
        %v234 = vpack.c.b16 %v226, %v224
        %v235 = vpack.c.b16 %v229, %v227
        %v236 = vpack.c.b16 %v230, %v228
        %v237 = vpack.c.b16 %v231, %v231
        %v238 = vpack.c.b16 %v232, %v232
        %vm243 = vcmask 293888
        %v245 = vsel %vm243, %v217, 0
        %vm247 = vcmask 1041408
        %v249 = vsel %vm247, %v237, 0
        %v252 = vsel %vm247, %v238, 0
        %254 = vmatpush.bf16.msra.mxu0 0
        %255 = vmatpush.bf16.msra.mxu0 0
        %256 = vmatpush.bf16.msra.mxu0 0
        %257 = vmatpush.bf16.msra.mxu0 0
        %258 = vmatpush.bf16.msra.mxu0 0
        %259 = vmatpush.bf16.msra.mxu0 %v249
        %260 = vmatpush.bf16.msra.mxu0 %v235
        %261 = vmatpush.bf16.msra.mxu0 %v233
        %262 = vmatmul.bf16.gmra.mxu0 %v245
        %v263 = vpop.f32.mrf.mxu0
        %v264 = vadd.f32 %v206, %v263
        %v265 = vpop.f32.mrf.mxu0
        %v266 = vadd.f32 %v211, %v265
        %267 = vdwg.mxu0
        %268 = vmatpush.bf16.msra.mxu0 0
        %269 = vmatpush.bf16.msra.mxu0 0
        %270 = vmatpush.bf16.msra.mxu0 0
        %271 = vmatpush.bf16.msra.mxu0 0
        %272 = vmatpush.bf16.msra.mxu0 0
        %273 = vmatpush.bf16.msra.mxu0 %v252
        %274 = vmatpush.bf16.msra.mxu0 %v236
        %275 = vmatpush.bf16.msra.mxu0 %v234
        %276 = vmatmul.bf16.gmra.mxu0 %v245
        %v277 = vpop.f32.mrf.mxu0
        %v278 = vadd.f32 %v206, %v277
        %v279 = vpop.f32.mrf.mxu0
        %v280 = vadd.f32 %v211, %v279
        %281 = vdwg.mxu0
        %v282 = vxor.u32 %v264, 2147483648
        %v283 = vxor.u32 %v278, 2147483648
        %v284 = vmul.f32 %v282, 1.442695
        %v285 = vpow.pop %v284
        %v286 = vmul.f32 %v283, 1.442695
        %v287 = vpow.pop %v286
        %v288 = vadd.f32 %v285, 1.0
        %v289 = vadd.f32 %v287, 1.0
        %v290 = vrcp.pop %v288
        %v291 = vmul.f32 %v288, %v290
        %v292 = vsub.f32 1.0, %v291
        %v293 = vmul.f32 %v290, %v292
        %v294 = vadd.f32 %v290, %v293
        %vm295 = vweird.f32 %v288
        %vm296 = vweird.f32 %v290
        %vm297 = vmor %vm295, %vm296
        %v298 = vsel %vm297, %v290, %v294
        %v299 = vand.u32 2147483647, %v288
        %vm300 = vcmp.eq.f32.partialorder %v299, 8.507059e+37
        %v301 = vand.u32 %v288, 2147483648
        %v302 = vor.u32 1.1754944e-38, %v301
        %v303 = vsel %vm300, %v302, %v298
        %v304 = vmul.f32 1.0, %v303
        %v305 = vrcp.pop %v289
        %v306 = vmul.f32 %v289, %v305
        %v307 = vsub.f32 1.0, %v306
        %v308 = vmul.f32 %v305, %v307
        %v309 = vadd.f32 %v305, %v308
        %vm310 = vweird.f32 %v289
        %vm311 = vweird.f32 %v305
        %vm312 = vmor %vm310, %vm311
        %v313 = vsel %vm312, %v305, %v309
        %v314 = vand.u32 2147483647, %v289
        %vm315 = vcmp.eq.f32.partialorder %v314, 8.507059e+37
        %v316 = vand.u32 %v289, 2147483648
        %v317 = vor.u32 1.1754944e-38, %v316
        %v318 = vsel %vm315, %v317, %v313
        %v319 = vmul.f32 1.0, %v318
        %vm320 = vcmp.gt.f32.partialorder %v266, 0.0
        %vm321 = vcmp.gt.f32.partialorder %v280, 0.0
        %v322 = vmin.f32 %v266, 0.0
        %v323 = vmin.f32 %v280, 0.0
        %v324 = vmul.f32 %v322, 1.442695
        %v325 = vpow.pop %v324
        %v326 = vmul.f32 %v323, 1.442695
        %v327 = vpow.pop %v326
        %v328 = vsub.f32 %v325, 1.0
        %v329 = vsub.f32 %v327, 1.0
        %v330 = vsel %vm320, %v266, %v328
        %v331 = vsel %vm321, %v280, %v329
        %v332 = vmul.f32 %v304, %v330
        %v333 = vmul.f32 %v319, %v331
        %334 = vst [vmem:[%s190] sm:$0xff] %v332
        %335 = vst [vmem:[%s190 + $0x8] sm:$0xff] %v333
        %s336 = sand.u32 %s96, 1
        %s337 = scalar_lea.sflag [#allocation4], %s336
        %s338 = sand.u32 %s96, 1
        %s339 = smul.addr %s338, 16
        %s340 = scalar_lea.vmem [#allocation5], %s339
        // Predicated region
        $region37: #{tpu_custom_call.1} parent=31 // pred_check
          %p341 = pneg %p106
        $region38: #{tpu_custom_call.1} parent=31 // pred_check_branch
          %343 = sbr.rel (%p341) target = $region40
        $region39: #{tpu_custom_call.1} parent=31 // pred_region
          %s344 = smul.u32 2, %s20
          %346 = vsyncadd %s337, 0
          %s347 = smul.addr %s344, 8
          %s348 = scalar_lea.hbm %s3, %s347
          %s350 = sshll.u32 %s340, 4
          %s351 = int_to_ptr.vmem [resolvable:$true] %s350
          %s352 = sshll.u32 %s348, 4
          %s353 = int_to_ptr.hbm [resolvable:$true] %s352
          %355 = dma.vmem_to_hbm [thread:$0]  %s351, 256, %s353, %s337
        $region40: #{tpu_custom_call.1} parent=31 // pred_fallthru
          _
      $region32: #{tpu_custom_call.1} parent=5 // pred_fallthru
        _
      %p356 = scmp.le.s32.totalorder 2, %s15
      // Predicated region
      $region41: #{tpu_custom_call.1} parent=5 // pred_check
        %p357 = pneg %p356
      $region42: #{tpu_custom_call.1} parent=5 // pred_check_branch
        %359 = sbr.rel (%p357) target = $region44
      $region43: #{tpu_custom_call.1} parent=5 // pred_region
        %s360 = ssub.s32 %s15, 2
        // Predicated region
        $region45: #{tpu_custom_call.1} parent=43 // pred_check
          %p361 = pneg %p112
        $region46: #{tpu_custom_call.1} parent=43 // pred_check_branch
          %363 = sbr.rel (%p361) target = $region48
        $region47: #{tpu_custom_call.1} parent=43 // pred_region
          %s364 = sand.u32 %s97, 1
          %s365 = scalar_lea.sflag [#allocation4], %s364
          %s366 = sand.u32 %s97, 1
          %s367 = smul.addr %s366, 16
          %s368 = scalar_lea.vmem [#allocation5], %s367
          %370 = dma.done %s365, 256
        $region48: #{tpu_custom_call.1} parent=43 // pred_fallthru
          _
      $region44: #{tpu_custom_call.1} parent=5 // pred_fallthru
        _
    $region6: #{tpu_custom_call.1} parent=1 // loop_footer
      %s19 = sadd.s32 1, %s15
    $region7: #{tpu_custom_call.1} parent=1 // loop_footer_branch
      %14 = sbr.rel target = $region3
    $region8: #{tpu_custom_call.1} parent=1 // loop_exit
      _
    %371 = vsyncpa [#allocation3], 1
    %s372 = scalar_lea.sflag [#allocation3], 1
    %373 = vsyncpa %s372, 1
    %374 = vsyncpa [#allocation4], 1
    %s375 = scalar_lea.sflag [#allocation4], 1
    %376 = vsyncpa %s375, 1

</llo_original>
